<compile_context>
chip_gen: v6e
topology: v6e:2x2x1
jax: 0.10.0
libtpu: 0.0.40
codegen_flags: <defaults>
</compile_context>

<pallas_src>
import functools

import jax
import jax.numpy as jnp
from jax.experimental import pallas as pl
from jax.experimental.pallas import tpu as pltpu


def _round_up(x, m):
    return ((x + m - 1) // m) * m


def complex_mlp_kernel(x_ref, w1_ref, b1_ref, w2_ref, b2_ref, y_ref):
    """Fused complex MLP on pre-packed real block matrices.

    x_ref : (tm, 2*din)     rows with interleaved (r0, i0, r1, i1, ...) features
    w1_ref: (2*din, 2*hid)  packed fc1; output columns are block [Hr | Hi]
    b1_ref: (1, 2*hid)      packed fc1 bias [b1r - b1i | b1r + b1i]
    w2_ref: (2*hid, 2*dout) packed fc2; output columns interleaved (r, i)
    b2_ref: (1, 2*dout)     packed fc2 bias, interleaved to match
    y_ref : (tm, 2*dout)
    """
    x = x_ref[...]
    # fc1 (apply_complex) as one wide matmul.
    h = jnp.dot(x, w1_ref[...], preferred_element_type=jnp.float32) + b1_ref[...]
    # ComplexSiLU (apply_complex_sep): SiLU independently on real/imag parts,
    # which is plain elementwise SiLU on the packed [Hr | Hi] activations.
    h = h * jax.nn.sigmoid(h)
    # ComplexDropout with p=0.0 is the identity (mask of ones).
    # TODO(synk): dropout1d-style masking for p > 0 in training mode.
    # fc2 (apply_complex) as one wide matmul; columns already (r,i)-interleaved.
    y = jnp.dot(h, w2_ref[...], preferred_element_type=jnp.float32) + b2_ref[...]
    y_ref[...] = y.astype(y_ref.dtype)


def pack_params(params):
    """Pack the 8 real Linear params into 2 block weights + 2 block biases.

    fc1 rows are (r,i)-interleaved to match the native (..., din, 2) memory
    layout; fc2 columns are (r,i)-interleaved so the kernel output reshapes to
    (..., dout, 2) with no stack. Done once at init.
    """
    (w1r, b1r, w1i, b1i, w2r, b2r, w2i, b2i) = params
    din, hid = w1r.shape
    dout = w2r.shape[1]

    w1_top = jnp.concatenate([w1r, w1i], axis=1)      # multiplies x_r[k]
    w1_bot = jnp.concatenate([-w1i, w1r], axis=1)     # multiplies x_i[k]
    w1c = jnp.stack([w1_top, w1_bot], axis=1).reshape(2 * din, 2 * hid)
    b1c = jnp.concatenate([b1r - b1i, b1r + b1i]).reshape(1, 2 * hid)

    w2_real = jnp.concatenate([w2r, -w2i], axis=0)    # -> y_r columns
    w2_imag = jnp.concatenate([w2i, w2r], axis=0)     # -> y_i columns
    w2c = jnp.stack([w2_real, w2_imag], axis=2).reshape(2 * hid, 2 * dout)
    b2c = jnp.stack([b2r - b2i, b2r + b2i], axis=1).reshape(1, 2 * dout)
    return (w1c, b1c, w2c, b2c)


@functools.partial(jax.jit, static_argnames=("tm",))
def complex_mlp(x, packed, tm=256):
    """x: (..., in_features, 2) f32 -> (..., out_features, 2) f32."""
    w1c, b1c, w2c, b2c = packed
    lead = x.shape[:-2]
    din2 = 2 * x.shape[-2]
    hid2 = w1c.shape[1]
    dout2 = w2c.shape[1]

    # Free row-major flatten: (..., din, 2) -> (M, 2*din); columns are already
    # in the interleaved (r0, i0, ...) order the packed fc1 weight expects.
    xc = x.reshape(-1, din2)
    m = xc.shape[0]

    # Big row tiles amortize the ~600-cycle per-grid-step overhead; pad the
    # ragged tail instead of asserting divisibility.
    tm_eff = min(tm, _round_up(m, 8))
    m_pad = _round_up(m, tm_eff)
    if m_pad != m:
        xc = jnp.pad(xc, ((0, m_pad - m), (0, 0)))

    cost = pl.CostEstimate(
        flops=2 * m_pad * din2 * hid2 + 2 * m_pad * hid2 * dout2,
        transcendentals=m_pad * hid2,
        bytes_accessed=4 * (m_pad * din2 + din2 * hid2 + hid2
                            + hid2 * dout2 + dout2 + m_pad * dout2),
    )

    full = lambda shape: pl.BlockSpec(shape, lambda i: (0, 0))
    y = pl.pallas_call(
        complex_mlp_kernel,
        out_shape=jax.ShapeDtypeStruct((m_pad, dout2), jnp.float32),
        grid_spec=pltpu.PrefetchScalarGridSpec(
            num_scalar_prefetch=0,
            grid=(m_pad // tm_eff,),
            in_specs=[
                pl.BlockSpec((tm_eff, din2), lambda i: (i, 0)),
                full((din2, hid2)),
                full((1, hid2)),
                full((hid2, dout2)),
                full((1, dout2)),
            ],
            out_specs=pl.BlockSpec((tm_eff, dout2), lambda i: (i, 0)),
        ),
        compiler_params=pltpu.CompilerParams(
            dimension_semantics=("parallel",)),
        cost_estimate=cost,
    )(xc, w1c, b1c, w2c, b2c)

    if m_pad != m:
        y = y[:m]
    # Interleaved (r, i) output columns -> free reshape to (..., dout, 2).
    return y.reshape(*lead, dout2 // 2, 2)


def init_params(key, in_features, hidden_features, out_features):
    """Deterministic nn.Linear-like init (uniform in +/- 1/sqrt(fan_in))."""
    ks = jax.random.split(key, 8)

    def lin(kw, kb, fan_in, fan_out):
        bound = 1.0 / jnp.sqrt(fan_in)
        w = jax.random.uniform(kw, (fan_in, fan_out), jnp.float32, -bound, bound)
        b = jax.random.uniform(kb, (fan_out,), jnp.float32, -bound, bound)
        return w, b

    w1r, b1r = lin(ks[0], ks[1], in_features, hidden_features)
    w1i, b1i = lin(ks[2], ks[3], in_features, hidden_features)
    w2r, b2r = lin(ks[4], ks[5], hidden_features, out_features)
    w2i, b2i = lin(ks[6], ks[7], hidden_features, out_features)
    return (w1r, b1r, w1i, b1i, w2r, b2r, w2i, b2i)


def complex_mlp_ref(x, params):
    """Pure-JAX reference matching the PyTorch forward semantics."""
    (w1r, b1r, w1i, b1i, w2r, b2r, w2i, b2i) = params
    xr, xi = x[..., 0], x[..., 1]
    hr = (xr @ w1r + b1r) - (xi @ w1i + b1i)
    hi = (xi @ w1r + b1r) + (xr @ w1i + b1i)
    hr = hr * jax.nn.sigmoid(hr)
    hi = hi * jax.nn.sigmoid(hi)
    yr = (hr @ w2r + b2r) - (hi @ w2i + b2i)
    yi = (hi @ w2r + b2r) + (hr @ w2i + b2i)
    return jnp.stack([yr, yi], axis=-1)


if __name__ == "__main__":
    in_features, hidden_features, out_features = 16, 32, 16

    key = jax.random.PRNGKey(0)
    kx, kx2, kp = jax.random.split(key, 3)
    params = init_params(kp, in_features, hidden_features, out_features)
    packed = pack_params(params)

    # Aligned row count.
    x = jax.random.normal(kx, (2, 8, in_features, 2), jnp.float32)
    y = jax.block_until_ready(complex_mlp(x, packed))
    y_ref = complex_mlp_ref(x, params)
    assert y.shape == (2, 8, out_features, 2)
    assert jnp.allclose(y, y_ref, atol=1e-4, rtol=1e-4)

    # Ragged row count exercises the pad-and-slice path.
    x2 = jax.random.normal(kx2, (3, 5, in_features, 2), jnp.float32)
    y2 = jax.block_until_ready(complex_mlp(x2, packed))
    y2_ref = complex_mlp_ref(x2, params)
    assert y2.shape == (3, 5, out_features, 2)
    assert jnp.allclose(y2, y2_ref, atol=1e-4, rtol=1e-4)

    print("KERNEL_OK")
</pallas_src>

<mosaic_0001>
module attributes {stable_mosaic.version = 11 : i64} {
  func.func @complex_mlp_kernel(%arg0: i32, %arg1: memref<16x32xf32, #tpu.memory_space<vmem>>, %arg2: memref<32x64xf32, #tpu.memory_space<vmem>>, %arg3: memref<1x64xf32, #tpu.memory_space<vmem>>, %arg4: memref<64x32xf32, #tpu.memory_space<vmem>>, %arg5: memref<1x32xf32, #tpu.memory_space<vmem>>, %arg6: memref<16x32xf32, #tpu.memory_space<vmem>>) attributes {dimension_semantics = [#tpu.dimension_semantics<parallel>], iteration_bounds = array<i64: 1>, scalar_prefetch = 0 : i64, scratch_operands = 0 : i64, tpu.core_type = #tpu.core_type<tc>, window_params = [{transform_indices = @transform_0, window_bounds = array<i64: 16, 32>}, {pipeline_mode = #tpu.pipeline_mode<synchronous>, transform_indices = @transform_1, window_bounds = array<i64: 32, 64>}, {pipeline_mode = #tpu.pipeline_mode<synchronous>, transform_indices = @transform_2, window_bounds = array<i64: 1, 64>}, {pipeline_mode = #tpu.pipeline_mode<synchronous>, transform_indices = @transform_3, window_bounds = array<i64: 64, 32>}, {pipeline_mode = #tpu.pipeline_mode<synchronous>, transform_indices = @transform_4, window_bounds = array<i64: 1, 32>}, {transform_indices = @transform_5, window_bounds = array<i64: 16, 32>}]} {
    %c0 = arith.constant 0 : index
    %c0_0 = arith.constant 0 : index
    %0 = vector.load %arg1[%c0, %c0_0] : memref<16x32xf32, #tpu.memory_space<vmem>>, vector<16x32xf32>
    %c0_1 = arith.constant 0 : index
    %c0_2 = arith.constant 0 : index
    %1 = vector.load %arg2[%c0_1, %c0_2] : memref<32x64xf32, #tpu.memory_space<vmem>>, vector<32x64xf32>
    %cst = arith.constant dense<0.000000e+00> : vector<16x64xf32>
    %2 = tpu.matmul %0, %1, %cst {dimension_numbers = #tpu.dot_dimension_numbers<[1], [0], [0], [1], [0, 0, 1, 1], [], []>} : vector<16x32xf32>, vector<32x64xf32>, vector<16x64xf32> -> vector<16x64xf32>
    %c0_3 = arith.constant 0 : index
    %c0_4 = arith.constant 0 : index
    %3 = vector.load %arg3[%c0_3, %c0_4] : memref<1x64xf32, #tpu.memory_space<vmem>>, vector<1x64xf32>
    %4 = vector.broadcast %3 : vector<1x64xf32> to vector<16x64xf32>
    %5 = arith.addf %2, %4 : vector<16x64xf32>
    %6 = arith.negf %5 : vector<16x64xf32>
    %7 = math.exp %6 : vector<16x64xf32>
    %cst_5 = arith.constant 1.000000e+00 : f32
    %8 = vector.broadcast %cst_5 : f32 to vector<16x64xf32>
    %9 = arith.addf %8, %7 : vector<16x64xf32>
    %10 = arith.divf %8, %9 : vector<16x64xf32>
    %11 = arith.mulf %5, %10 : vector<16x64xf32>
    %c0_6 = arith.constant 0 : index
    %c0_7 = arith.constant 0 : index
    %12 = vector.load %arg4[%c0_6, %c0_7] : memref<64x32xf32, #tpu.memory_space<vmem>>, vector<64x32xf32>
    %cst_8 = arith.constant dense<0.000000e+00> : vector<16x32xf32>
    %13 = tpu.matmul %11, %12, %cst_8 {dimension_numbers = #tpu.dot_dimension_numbers<[1], [0], [0], [1], [0, 0, 1, 1], [], []>} : vector<16x64xf32>, vector<64x32xf32>, vector<16x32xf32> -> vector<16x32xf32>
    %c0_9 = arith.constant 0 : index
    %c0_10 = arith.constant 0 : index
    %14 = vector.load %arg5[%c0_9, %c0_10] : memref<1x32xf32, #tpu.memory_space<vmem>>, vector<1x32xf32>
    %15 = vector.broadcast %14 : vector<1x32xf32> to vector<16x32xf32>
    %16 = arith.addf %13, %15 : vector<16x32xf32>
    %c0_11 = arith.constant 0 : index
    %c0_12 = arith.constant 0 : index
    %17 = vector.load %arg6[%c0_11, %c0_12] : memref<16x32xf32, #tpu.memory_space<vmem>>, vector<16x32xf32>
    tpu.vector_store %arg6[%c0_11, %c0_12], %16 {strides = array<i32>} : memref<16x32xf32, #tpu.memory_space<vmem>>, vector<16x32xf32>,
    return
  }
  func.func @transform_0(%arg0: i32) -> (i32, i32) {
    %c0_i32 = arith.constant 0 : i32
    %c0_i32_0 = arith.constant 0 : i32
    return %arg0, %c0_i32 : i32, i32
  }
  func.func @transform_1(%arg0: i32) -> (i32, i32) {
    %c0_i32 = arith.constant 0 : i32
    %c0_i32_0 = arith.constant 0 : i32
    %c0_i32_1 = arith.constant 0 : i32
    return %c0_i32, %c0_i32_0 : i32, i32
  }
  func.func @transform_2(%arg0: i32) -> (i32, i32) {
    %c0_i32 = arith.constant 0 : i32
    %c0_i32_0 = arith.constant 0 : i32
    %c0_i32_1 = arith.constant 0 : i32
    return %c0_i32, %c0_i32_0 : i32, i32
  }
  func.func @transform_3(%arg0: i32) -> (i32, i32) {
    %c0_i32 = arith.constant 0 : i32
    %c0_i32_0 = arith.constant 0 : i32
    %c0_i32_1 = arith.constant 0 : i32
    return %c0_i32, %c0_i32_0 : i32, i32
  }
  func.func @transform_4(%arg0: i32) -> (i32, i32) {
    %c0_i32 = arith.constant 0 : i32
    %c0_i32_0 = arith.constant 0 : i32
    %c0_i32_1 = arith.constant 0 : i32
    return %c0_i32, %c0_i32_0 : i32, i32
  }
  func.func @transform_5(%arg0: i32) -> (i32, i32) {
    %c0_i32 = arith.constant 0 : i32
    %c0_i32_0 = arith.constant 0 : i32
    return %arg0, %c0_i32 : i32, i32
  }
}

</mosaic_0001>

<llo_original>
// kernel: complex_mlp.1
$region0: #{complex_mlp.1}
  #allocation0 [shape = 'u32[]', space=smem, size = 0x4, offset = 0x4, fixed_abs, tag = 'smem constant byte address 0x4 - core index']
  #allocation1 [shape = 'u32[144,128]{1,0:T(1,128)}', space=vmem, size = 0x12000, scoped, tag = 'internal scratch']
  %s0 = inlined_call_operand.vmem [shape: f32[16,32], index: 0, kind: input, shape index: {}]
  %s1 = inlined_call_operand.vmem [shape: f32[32,64], index: 1, kind: input, shape index: {}]
  %s2 = inlined_call_operand.vmem [shape: f32[1,64], index: 2, kind: input, shape index: {}]
  %s3 = inlined_call_operand.vmem [shape: f32[64,32], index: 3, kind: input, shape index: {}]
  %s4 = inlined_call_operand.vmem [shape: f32[1,32], index: 4, kind: input, shape index: {}]
  %s5 = inlined_call_operand.vmem [shape: f32[16,32], index: 5, kind: output, shape index: {}]
  %s6 = sld [smem:[#allocation0]]
  $region30: #{complex_mlp.1} parent=0
    _
  %s8 = ssub.s32 1, %s6
  %s9 = scalar_select 0, %s8, %s6
  // Predicated region
  $region2: #{complex_mlp.1} parent=0 // pred_check
    _
  $region3: #{complex_mlp.1} parent=0 // pred_check_branch
    %11 = sbr.rel (0) target = $region5
  $region4: #{complex_mlp.1} parent=0 // pred_region
    _
  $region5: #{complex_mlp.1} parent=0 // pred_fallthru
    _
  // Predicated region
  $region6: #{complex_mlp.1} parent=0 // pred_check
    _
  $region7: #{complex_mlp.1} parent=0 // pred_check_branch
    %13 = sbr.rel (0) target = $region9
  $region8: #{complex_mlp.1} parent=0 // pred_region
    _
  $region9: #{complex_mlp.1} parent=0 // pred_fallthru
    _
  // Predicated region
  $region10: #{complex_mlp.1} parent=0 // pred_check
    _
  $region11: #{complex_mlp.1} parent=0 // pred_check_branch
    %15 = sbr.rel (0) target = $region13
  $region12: #{complex_mlp.1} parent=0 // pred_region
    _
  $region13: #{complex_mlp.1} parent=0 // pred_fallthru
    _
  // Predicated region
  $region14: #{complex_mlp.1} parent=0 // pred_check
    _
  $region15: #{complex_mlp.1} parent=0 // pred_check_branch
    %17 = sbr.rel (0) target = $region17
  $region16: #{complex_mlp.1} parent=0 // pred_region
    _
  $region17: #{complex_mlp.1} parent=0 // pred_fallthru
    _
  // Predicated region
  $region18: #{complex_mlp.1} parent=0 // pred_check
    _
  $region19: #{complex_mlp.1} parent=0 // pred_check_branch
    %19 = sbr.rel (0) target = $region21
  $region20: #{complex_mlp.1} parent=0 // pred_region
    _
  $region21: #{complex_mlp.1} parent=0 // pred_fallthru
    _
  %v20 = vld [vmem:[%s0] sm:$0xff]
  %v21 = vld [vmem:[%s0 + $0x8] sm:$0xff]
  %v22 = vld [vmem:[%s1] sm:$0xff]
  %v23 = vld [vmem:[%s1 + $0x8] sm:$0xff]
  %v24 = vld [vmem:[%s1 + $0x10] sm:$0xff]
  %v25 = vld [vmem:[%s1 + $0x18] sm:$0xff]
  %v26 = vld [vmem:[%s2] sm:$0x1]
  %v28 = vlaneseq
  %v29 = vshrl.u32 %v28, 7
  %v30 = vsub.s32 0, %v29
  %v31 = vrot.slane %v26, %v30
  %vm33 = vcmask 261120
  %v35 = vsel %vm33, %v20, 0
  %v38 = vsel %vm33, %v21, 0
  %40 = vmatprep.subr.mxu0 0.0
  %41 = vmatpush1.msra.mxu0 0.0
  %42 = vmatprep.subr.mxu0 0.0
  %43 = vmatpush1.msra.mxu0 0.0
  %44 = vmatprep.subr.mxu0 0.0
  %45 = vmatpush1.msra.mxu0 0.0
  %46 = vmatprep.subr.mxu0 0.0
  %47 = vmatpush1.msra.mxu0 0.0
  %48 = vmatprep.subr.mxu0 0.0
  %49 = vmatpush1.msra.mxu0 0.0
  %50 = vmatprep.subr.mxu0 0.0
  %51 = vmatpush1.msra.mxu0 0.0
  %52 = vmatprep.subr.mxu0 0.0
  %53 = vmatpush1.msra.mxu0 0.0
  %54 = vmatprep.subr.mxu0 0.0
  %55 = vmatpush1.msra.mxu0 0.0
  %56 = vmatprep.subr.mxu0 0.0
  %57 = vmatpush1.msra.mxu0 0.0
  %58 = vmatprep.subr.mxu0 0.0
  %59 = vmatpush1.msra.mxu0 0.0
  %60 = vmatprep.subr.mxu0 0.0
  %61 = vmatpush1.msra.mxu0 0.0
  %62 = vmatprep.subr.mxu0 0.0
  %63 = vmatpush1.msra.mxu0 0.0
  %64 = vmatprep.subr.mxu0 0.0
  %65 = vmatpush1.msra.mxu0 %v25
  %66 = vmatprep.subr.mxu0 0.0
  %67 = vmatpush1.msra.mxu0 %v24
  %68 = vmatprep.subr.mxu0 0.0
  %69 = vmatpush1.msra.mxu0 %v23
  %70 = vmatprep.subr.mxu0 0.0
  %71 = vmatpush1.msra.mxu0 %v22
  %72 = vmatprep.subr.mxu0 0.0
  %73 = vmatpush2.msra.mxu0 0.0
  %74 = vmatprep.subr.mxu0 0.0
  %75 = vmatpush2.msra.mxu0 0.0
  %76 = vmatprep.subr.mxu0 0.0
  %77 = vmatpush2.msra.mxu0 0.0
  %78 = vmatprep.subr.mxu0 0.0
  %79 = vmatpush2.msra.mxu0 0.0
  %80 = vmatprep.subr.mxu0 0.0
  %81 = vmatpush2.msra.mxu0 0.0
  %82 = vmatprep.subr.mxu0 0.0
  %83 = vmatpush2.msra.mxu0 0.0
  %84 = vmatprep.subr.mxu0 0.0
  %85 = vmatpush2.msra.mxu0 0.0
  %86 = vmatprep.subr.mxu0 0.0
  %87 = vmatpush2.msra.mxu0 0.0
  %88 = vmatprep.subr.mxu0 0.0
  %89 = vmatpush2.msra.mxu0 0.0
  %90 = vmatprep.subr.mxu0 0.0
  %91 = vmatpush2.msra.mxu0 0.0
  %92 = vmatprep.subr.mxu0 0.0
  %93 = vmatpush2.msra.mxu0 0.0
  %94 = vmatprep.subr.mxu0 0.0
  %95 = vmatpush2.msra.mxu0 0.0
  %96 = vmatprep.subr.mxu0 0.0
  %97 = vmatpush2.msra.mxu0 0.0
  %98 = vmatprep.subr.mxu0 0.0
  %99 = vmatpush2.msra.mxu0 0.0
  %100 = vmatprep.subr.mxu0 0.0
  %101 = vmatpush2.msra.mxu0 0.0
  %102 = vmatprep.subr.mxu0 0.0
  %103 = vmatpush2.msra.mxu0 0.0
  %104 = vmatprep.mubr.f32.mxu0 0.0
  %105 = vmatmul.mubr.f32.gmra.mxu0 %v35
  %v106 = vpop.f32.mrf.mxu0
  %v107 = vadd.f32 %v31, %v106
  %v108 = vpop.f32.mrf.mxu0
  %109 = vmatprep.mubr.f32.mxu0 0.0
  %110 = vmatmul.mubr.f32.gmra.mxu0 %v38
  %v111 = vpop.f32.mrf.mxu0
  %v112 = vadd.f32 %v31, %v111
  %v113 = vpop.f32.mrf.mxu0
  %114 = vdwg.mxu0
  %v115 = vxor.u32 %v107, 2147483648
  %v116 = vxor.u32 %v112, 2147483648
  %v117 = vmul.f32 %v115, 1.442695
  %v118 = vpow.pop %v117
  %v119 = vmul.f32 %v116, 1.442695
  %v120 = vpow.pop %v119
  %v121 = vadd.f32 %v118, 1.0
  %v122 = vadd.f32 %v120, 1.0
  %v123 = vrcp.pop %v121
  %v124 = vmul.f32 1.0, %v123
  %v125 = vrcp.pop %v122
  %v126 = vmul.f32 1.0, %v125
  %v127 = vmul.f32 %v107, %v124
  %v128 = vmul.f32 %v112, %v126
  %v129 = vld [vmem:[%s3] sm:$0xff]
  %v130 = vld [vmem:[%s3 + $0x8] sm:$0xff]
  %v131 = vld [vmem:[%s3 + $0x10] sm:$0xff]
  %v132 = vld [vmem:[%s3 + $0x18] sm:$0xff]
  %v133 = vld [vmem:[%s3 + $0x20] sm:$0xff]
  %v134 = vld [vmem:[%s3 + $0x28] sm:$0xff]
  %v135 = vld [vmem:[%s3 + $0x30] sm:$0xff]
  %v136 = vld [vmem:[%s3 + $0x38] sm:$0xff]
  %v137 = vld [vmem:[%s4] sm:$0x1]
  %v139 = vlaneseq
  %v140 = vshrl.u32 %v139, 7
  %v141 = vsub.s32 0, %v140
  %v142 = vrot.slane %v137, %v141
  %vm144 = vcmask 523264
  %v146 = vsel %vm144, %v127, 0
  %v149 = vsel %vm144, %v128, 0
  %151 = vmatprep.subr.mxu0 0.0
  %152 = vmatpush1.msra.mxu0 0.0
  %153 = vmatprep.subr.mxu0 0.0
  %154 = vmatpush1.msra.mxu0 0.0
  %155 = vmatprep.subr.mxu0 0.0
  %156 = vmatpush1.msra.mxu0 0.0
  %157 = vmatprep.subr.mxu0 0.0
  %158 = vmatpush1.msra.mxu0 0.0
  %159 = vmatprep.subr.mxu0 0.0
  %160 = vmatpush1.msra.mxu0 0.0
  %161 = vmatprep.subr.mxu0 0.0
  %162 = vmatpush1.msra.mxu0 0.0
  %163 = vmatprep.subr.mxu0 0.0
  %164 = vmatpush1.msra.mxu0 0.0
  %165 = vmatprep.subr.mxu0 0.0
  %166 = vmatpush1.msra.mxu0 0.0
  %167 = vmatprep.subr.mxu0 0.0
  %168 = vmatpush1.msra.mxu0 %v136
  %169 = vmatprep.subr.mxu0 0.0
  %170 = vmatpush1.msra.mxu0 %v135
  %171 = vmatprep.subr.mxu0 0.0
  %172 = vmatpush1.msra.mxu0 %v134
  %173 = vmatprep.subr.mxu0 0.0
  %174 = vmatpush1.msra.mxu0 %v133
  %175 = vmatprep.subr.mxu0 0.0
  %176 = vmatpush1.msra.mxu0 %v132
  %177 = vmatprep.subr.mxu0 0.0
  %178 = vmatpush1.msra.mxu0 %v131
  %179 = vmatprep.subr.mxu0 0.0
  %180 = vmatpush1.msra.mxu0 %v130
  %181 = vmatprep.subr.mxu0 0.0
  %182 = vmatpush1.msra.mxu0 %v129
  %183 = vmatprep.subr.mxu0 0.0
  %184 = vmatpush2.msra.mxu0 0.0
  %185 = vmatprep.subr.mxu0 0.0
  %186 = vmatpush2.msra.mxu0 0.0
  %187 = vmatprep.subr.mxu0 0.0
  %188 = vmatpush2.msra.mxu0 0.0
  %189 = vmatprep.subr.mxu0 0.0
  %190 = vmatpush2.msra.mxu0 0.0
  %191 = vmatprep.subr.mxu0 0.0
  %192 = vmatpush2.msra.mxu0 0.0
  %193 = vmatprep.subr.mxu0 0.0
  %194 = vmatpush2.msra.mxu0 0.0
  %195 = vmatprep.subr.mxu0 0.0
  %196 = vmatpush2.msra.mxu0 0.0
  %197 = vmatprep.subr.mxu0 0.0
  %198 = vmatpush2.msra.mxu0 0.0
  %199 = vmatprep.subr.mxu0 0.0
  %200 = vmatpush2.msra.mxu0 0.0
  %201 = vmatprep.subr.mxu0 0.0
  %202 = vmatpush2.msra.mxu0 0.0
  %203 = vmatprep.subr.mxu0 0.0
  %204 = vmatpush2.msra.mxu0 0.0
  %205 = vmatprep.subr.mxu0 0.0
  %206 = vmatpush2.msra.mxu0 0.0
  %207 = vmatprep.subr.mxu0 0.0
  %208 = vmatpush2.msra.mxu0 0.0
  %209 = vmatprep.subr.mxu0 0.0
  %210 = vmatpush2.msra.mxu0 0.0
  %211 = vmatprep.subr.mxu0 0.0
  %212 = vmatpush2.msra.mxu0 0.0
  %213 = vmatprep.subr.mxu0 0.0
  %214 = vmatpush2.msra.mxu0 0.0
  %215 = vmatprep.mubr.f32.mxu0 0.0
  %216 = vmatmul.mubr.f32.gmra.mxu0 %v146
  %v217 = vpop.f32.mrf.mxu0
  %v218 = vadd.f32 %v142, %v217
  %v219 = vpop.f32.mrf.mxu0
  %220 = vmatprep.mubr.f32.mxu0 0.0
  %221 = vmatmul.mubr.f32.gmra.mxu0 %v149
  %v222 = vpop.f32.mrf.mxu0
  %v223 = vadd.f32 %v142, %v222
  %v224 = vpop.f32.mrf.mxu0
  %225 = vdwg.mxu0
  %226 = vst.msk [vmem:[%s5] sm:$0xff] %vm33, %v218
  %227 = vst.msk [vmem:[%s5 + $0x8] sm:$0xff] %vm33, %v223
  // Predicated region
  $region22: #{complex_mlp.1} parent=0 // pred_check
    _
  $region23: #{complex_mlp.1} parent=0 // pred_check_branch
    %229 = sbr.rel (0) target = $region25
  $region24: #{complex_mlp.1} parent=0 // pred_region
    _
  $region25: #{complex_mlp.1} parent=0 // pred_fallthru
    _
  // Predicated region
  $region26: #{complex_mlp.1} parent=0 // pred_check
    _
  $region27: #{complex_mlp.1} parent=0 // pred_check_branch
    %231 = sbr.rel (0) target = $region29
  $region28: #{complex_mlp.1} parent=0 // pred_region
    _
  $region29: #{complex_mlp.1} parent=0 // pred_fallthru
    _

</llo_original>
